<compile_context>
chip_gen: v5e
topology: v5e:2x2
jax: 0.10.0
libtpu: 0.0.40
codegen_flags: <defaults>
</compile_context>

<pallas_src>
import math

import jax
import jax.numpy as jnp
from jax.experimental import pallas as pl
from jax.experimental.pallas import tpu as pltpu

_TARGET_TILE_BYTES = 4 << 20   # ~4 MiB x tile per grid step (HBM streaming)
_MIN_GRID_STEPS = 8            # keep a multi-step "parallel" grid on big inputs


def _build_pos_embedding(emb_size: int, maxlen: int) -> jnp.ndarray:
    """Deterministic sinusoidal table, identical to the PyTorch __init__."""
    assert emb_size % 2 == 0, "sinusoidal table requires an even emb_size"
    den = jnp.exp(-jnp.arange(0, emb_size, 2, dtype=jnp.float32)
                  * (math.log(10000.0) / emb_size))                 # (E/2,)
    pos = jnp.arange(0, maxlen, dtype=jnp.float32)[:, None]          # (maxlen, 1)
    angles = pos * den[None, :]                                       # (maxlen, E/2)
    pe = jnp.zeros((maxlen, emb_size), dtype=jnp.float32)
    pe = pe.at[:, 0::2].set(jnp.sin(angles))
    pe = pe.at[:, 1::2].set(jnp.cos(angles))
    return pe                                                         # (maxlen, E)


def _pe_add_kernel(x_ref, pe_ref, o_ref):
    # Pure vld + vadd + vst; pe broadcasts over the leading (batch) axis.
    o_ref[...] = (x_ref[...] + pe_ref[...]).astype(o_ref.dtype)


def _round_down(v: int, m: int) -> int:
    return (v // m) * m


def _compiler_params(x_tile_bytes: int, pe_tile_bytes: int) -> pltpu.CompilerParams:
    # Double-buffered footprint: 2 buffers each for x-in and out, 2 for pe.
    vmem = 2 * (2 * x_tile_bytes) + 2 * pe_tile_bytes
    vmem_limit = int(min(48 << 20, max(32 << 20, vmem + (8 << 20))))
    return pltpu.CompilerParams(
        dimension_semantics=("parallel",),
        vmem_limit_bytes=vmem_limit,
    )


def _forward_3d(x: jnp.ndarray, pe: jnp.ndarray) -> jnp.ndarray:
    """E % 128 == 0 path: (B, TILE_S, E) blocks, no sublane padding for small B."""
    B, S, E = x.shape
    itemsize = x.dtype.itemsize
    sub = 8 if itemsize >= 4 else 16          # sublane granularity (f32 / bf16)
    if S <= sub:
        tile_s = S                            # full-S block (legal: full dim)
    else:
        by_bytes = _TARGET_TILE_BYTES // max(1, B * E * itemsize)
        by_steps = pl.cdiv(S, _MIN_GRID_STEPS)
        tile_s = max(sub, _round_down(min(by_bytes, by_steps), sub))
        tile_s = min(tile_s, S)
    grid = (pl.cdiv(S, tile_s),)

    x_tile_bytes = B * tile_s * E * itemsize
    pe_tile_bytes = max(tile_s, sub) * E * itemsize
    pe3 = pe.reshape(1, S, E)

    return pl.pallas_call(
        _pe_add_kernel,
        out_shape=jax.ShapeDtypeStruct((B, S, E), x.dtype),
        grid=grid,
        in_specs=[
            pl.BlockSpec((B, tile_s, E), lambda s: (0, s, 0)),   # x tile
            pl.BlockSpec((1, tile_s, E), lambda s: (0, s, 0)),   # pe tile (1/B traffic)
        ],
        out_specs=pl.BlockSpec((B, tile_s, E), lambda s: (0, s, 0)),
        input_output_aliases={0: 0},          # in-place when caller donates x
        compiler_params=_compiler_params(x_tile_bytes, pe_tile_bytes),
    )(x, pe3)


def _forward_flat(x: jnp.ndarray, pe: jnp.ndarray) -> jnp.ndarray:
    """Fallback for E not a multiple of 128: lane-dense flattened (B, S*E) layout."""
    B, S, E = x.shape
    itemsize = x.dtype.itemsize
    flat = S * E
    sub_rows = max(B, 8 if itemsize >= 4 else 16)   # sublane-padded rows of the x tile
    if flat <= 128:
        chunk = flat                                # full-width block (legal)
    else:
        by_bytes = _TARGET_TILE_BYTES // max(1, sub_rows * itemsize)
        by_steps = pl.cdiv(flat, _MIN_GRID_STEPS)
        chunk = max(128, _round_down(min(by_bytes, by_steps), 128))
        chunk = min(chunk, flat)
    grid = (pl.cdiv(flat, chunk),)                  # no divisibility requirement

    x_tile_bytes = sub_rows * chunk * itemsize
    pe_tile_bytes = 8 * chunk * itemsize            # (1, chunk) pads to 8 sublanes

    x2d = x.reshape(B, flat)
    pe2d = pe.reshape(1, flat)

    out2d = pl.pallas_call(
        _pe_add_kernel,
        out_shape=jax.ShapeDtypeStruct((B, flat), x.dtype),
        grid=grid,
        in_specs=[
            pl.BlockSpec((B, chunk), lambda c: (0, c)),
            pl.BlockSpec((1, chunk), lambda c: (0, c)),
        ],
        out_specs=pl.BlockSpec((B, chunk), lambda c: (0, c)),
        input_output_aliases={0: 0},
        compiler_params=_compiler_params(x_tile_bytes, pe_tile_bytes),
    )(x2d, pe2d)
    return out2d.reshape(B, S, E)


def positional_encoding_forward(token_embedding: jnp.ndarray,
                                pos_embedding: jnp.ndarray,
                                dropout: float = 0.0) -> jnp.ndarray:
    """Equivalent of PositionalEncoding.forward (token_embedding: (B, S, E))."""
    # TODO(synk): non-zero dropout would be fused here (pltpu.prng_seed +
    # pltpu.prng_random_bits masking); the module default (p=0) is the identity.
    assert dropout == 0.0, "only dropout=0 (module default) is supported"
    B, S, E = token_embedding.shape
    maxlen, pe_e = pos_embedding.shape
    assert pe_e == E, f"pos_embedding width {pe_e} != emb_size {E}"
    assert S <= maxlen, f"sequence length {S} exceeds maxlen {maxlen}"

    # Cast pe to the activation dtype in the wrapper (halves pe DMA for bf16).
    pe = pos_embedding[:S, :].astype(token_embedding.dtype)

    if E % 128 == 0:
        return _forward_3d(token_embedding, pe)
    return _forward_flat(token_embedding, pe)


if __name__ == "__main__":
    MAXLEN = 64      # small synthetic table (same formula as maxlen=5000)
    key = jax.random.PRNGKey(0)
    k1, k2 = jax.random.split(key)

    # Donate x so the input_output_aliases add is truly in-place.
    fwd = jax.jit(positional_encoding_forward, donate_argnums=(0,))

    # Case 1: E multiple of 128 -> 3-D blocked path (no sublane padding).
    B, S, E = 2, 16, 128
    pe_tab = _build_pos_embedding(E, MAXLEN)
    x1 = jax.random.normal(k1, (B, S, E), dtype=jnp.float32)
    ref1 = x1 + pe_tab[None, :S, :]          # computed before x1 is donated
    y1 = jax.block_until_ready(fwd(x1, pe_tab))
    assert y1.shape == (B, S, E)
    assert jnp.allclose(y1, ref1, atol=1e-6), "3-D path mismatch vs reference"

    # Case 2: E not a multiple of 128 -> flattened lane-dense fallback path.
    B2, S2, E2 = 2, 8, 32
    pe_tab2 = _build_pos_embedding(E2, MAXLEN)
    x2 = jax.random.normal(k2, (B2, S2, E2), dtype=jnp.float32)
    ref2 = x2 + pe_tab2[None, :S2, :]
    y2 = jax.block_until_ready(fwd(x2, pe_tab2))
    assert y2.shape == (B2, S2, E2)
    assert jnp.allclose(y2, ref2, atol=1e-6), "flat path mismatch vs reference"

    print("KERNEL_OK")
</pallas_src>

<mosaic_0001>
module attributes {stable_mosaic.version = 11 : i64} {
  func.func @_pe_add_kernel(%arg0: i32, %arg1: memref<2x8x128xf32, #tpu.memory_space<vmem>>, %arg2: memref<1x8x128xf32, #tpu.memory_space<vmem>>, %arg3: memref<2x8x128xf32, #tpu.memory_space<vmem>>) attributes {dimension_semantics = [#tpu.dimension_semantics<parallel>], iteration_bounds = array<i64: 2>, scalar_prefetch = 0 : i64, scratch_operands = 0 : i64, tpu.core_type = #tpu.core_type<tc>, window_params = [{transform_indices = @transform_0, window_bounds = array<i64: 2, 8, 128>}, {transform_indices = @transform_1, window_bounds = array<i64: 1, 8, 128>}, {transform_indices = @transform_2, window_bounds = array<i64: 2, 8, 128>}]} {
    %c0 = arith.constant 0 : index
    %c0_0 = arith.constant 0 : index
    %c0_1 = arith.constant 0 : index
    %0 = vector.load %arg1[%c0, %c0_0, %c0_1] : memref<2x8x128xf32, #tpu.memory_space<vmem>>, vector<2x8x128xf32>
    %c0_2 = arith.constant 0 : index
    %c0_3 = arith.constant 0 : index
    %c0_4 = arith.constant 0 : index
    %1 = vector.load %arg2[%c0_2, %c0_3, %c0_4] : memref<1x8x128xf32, #tpu.memory_space<vmem>>, vector<1x8x128xf32>
    %2 = vector.broadcast %1 : vector<1x8x128xf32> to vector<2x8x128xf32>
    %3 = arith.addf %0, %2 : vector<2x8x128xf32>
    %c0_5 = arith.constant 0 : index
    %c0_6 = arith.constant 0 : index
    %c0_7 = arith.constant 0 : index
    %4 = vector.load %arg3[%c0_5, %c0_6, %c0_7] : memref<2x8x128xf32, #tpu.memory_space<vmem>>, vector<2x8x128xf32>
    tpu.vector_store %arg3[%c0_5, %c0_6, %c0_7], %3 {strides = array<i32>} : memref<2x8x128xf32, #tpu.memory_space<vmem>>, vector<2x8x128xf32>,
    return
  }
  func.func @transform_0(%arg0: i32) -> (i32, i32, i32) {
    %c0_i32 = arith.constant 0 : i32
    %c0_i32_0 = arith.constant 0 : i32
    %c0_i32_1 = arith.constant 0 : i32
    return %c0_i32, %arg0, %c0_i32_0 : i32, i32, i32
  }
  func.func @transform_1(%arg0: i32) -> (i32, i32, i32) {
    %c0_i32 = arith.constant 0 : i32
    %c0_i32_0 = arith.constant 0 : i32
    %c0_i32_1 = arith.constant 0 : i32
    return %c0_i32, %arg0, %c0_i32_0 : i32, i32, i32
  }
  func.func @transform_2(%arg0: i32) -> (i32, i32, i32) {
    %c0_i32 = arith.constant 0 : i32
    %c0_i32_0 = arith.constant 0 : i32
    %c0_i32_1 = arith.constant 0 : i32
    return %c0_i32, %arg0, %c0_i32_0 : i32, i32, i32
  }
}

</mosaic_0001>

<llo_original>
// kernel: positional_encoding_forward.1
$region0: #{positional_encoding_forward.1}
  #allocation0 [shape = 'u32[]', space=smem, size = 0x4, offset = 0x4, fixed_abs, tag = 'smem constant byte address 0x4 - core index']
  #allocation1 [shape = 'u32[72,128]{1,0:T(1,128)}', space=vmem, size = 0x9000, scoped, tag = 'internal scratch']
  %s0 = inlined_call_operand.hbm [shape: f32[2,16,128], index: 0, kind: input, shape index: {}, may-alias: {0,2}]
  %s1 = inlined_call_operand.vmem [shape: f32[1,16,128], index: 1, kind: input, shape index: {}]
  %s2 = inlined_call_operand.hbm [shape: f32[2,16,128], index: 2, kind: output, shape index: {}, may-alias: {0,2}]
  %s3 = sld [smem:[#allocation0]]
  $region45: #{positional_encoding_forward.1} parent=0
    _
  %s5 = ssub.s32 1, %s3
  %s6 = scalar_select 0, %s5, %s3
  $region1: #{positional_encoding_forward.1} parent=0
    #allocation2 [shape = 'u8[16384]{0}', space=vmem, size = 0x4000, scoped, tag = 'input window, operand 0']
    #allocation3 [shape = 's32[2]{0}', space=sflag, size = 0x8, scoped, tag = 'scoped memory for positional_encoding_forward.1']
    #allocation4 [shape = 's32[2]{0}', space=sflag, size = 0x8, scoped, tag = 'scoped memory for positional_encoding_forward.1']
    #allocation5 [shape = 'u8[16384]{0}', space=vmem, size = 0x4000, scoped, tag = 'output window, operand 0']
    %7 = vsyncpa [#allocation3], 0
    %s8 = scalar_lea.sflag [#allocation3], 1
    %9 = vsyncpa %s8, 0
    %10 = vsyncpa [#allocation4], 0
    %s11 = scalar_lea.sflag [#allocation4], 1
    %12 = vsyncpa %s11, 0
    loop: start=0, step=1, limit=4
    $region2: #{positional_encoding_forward.1} parent=1 // loop_pre_header
      _
    $region3: #{positional_encoding_forward.1} parent=1 // loop_header
      %s14 = sphi 0, %s18
      %p15 = scmp.ge.s32.totalorder %s14, 4
      %s24 = sphi 0, %s26
      %s27 = sphi 0, %s24
      %s28 = sphi 0, %s27
      %s44 = sphi 0, %s28
      %s50 = sphi 0, %s52
      %s53 = sphi 0, %s50
      %s54 = sphi 0, %s53
      %s70 = sphi 0, %s54
      %s76 = sphi 0, %s78
      %s79 = sphi 0, %s76
      %s80 = sphi 0, %s79
      %s96 = sphi 0, %s80
    $region4: #{positional_encoding_forward.1} parent=1 // loop_header_branch
      %17 = sbr.rel (%p15) target = $region8
    $region5: #{positional_encoding_forward.1} parent=1 // loop_body
      %s19 = ssub.s32 %s14, 1
      %s20 = ssub.s32 %s14, 2
      %s21 = sadd.s32 %s14, 1
      %s22 = ssub.s32 %s14, %s21
      %p23 = scmp.eq.s32.totalorder %s22, 0
      %s25 = sadd.s32 %s24, 1
      %s26 = scalar_select %p23, %s24, %s25
      %p29 = pneg %p23
      %p30 = scmp.eq.s32.totalorder %s14, 1
      %p31 = por %p29, %p30
      %p32 = scmp.ne.s32.totalorder %s24, %s27
      %p33 = scmp.eq.s32.totalorder %s14, 0
      %p34 = por %p32, %p33
      %p35 = scmp.ne.s32.totalorder %s24, %s27
      %p36 = scmp.eq.s32.totalorder %s19, 1
      %p37 = por %p35, %p36
      %p38 = scmp.ne.s32.totalorder %s27, %s28
      %p39 = scmp.eq.s32.totalorder %s19, 0
      %p40 = por %p38, %p39
      %p41 = scmp.ne.s32.totalorder %s27, %s28
      %p42 = scmp.eq.s32.totalorder %s20, 1
      %p43 = por %p41, %p42
      %p45 = scmp.ne.s32.totalorder %s28, %s44
      %p46 = scmp.eq.s32.totalorder %s20, 0
      %p47 = por %p45, %p46
      %s48 = ssub.s32 %s14, %s21
      %p49 = scmp.eq.s32.totalorder %s48, 0
      %s51 = sadd.s32 %s50, 1
      %s52 = scalar_select %p49, %s50, %s51
      %p55 = pneg %p49
      %p56 = scmp.eq.s32.totalorder %s14, 1
      %p57 = por %p55, %p56
      %p58 = scmp.ne.s32.totalorder %s50, %s53
      %p59 = scmp.eq.s32.totalorder %s14, 0
      %p60 = por %p58, %p59
      %p61 = scmp.ne.s32.totalorder %s50, %s53
      %p62 = scmp.eq.s32.totalorder %s19, 1
      %p63 = por %p61, %p62
      %p64 = scmp.ne.s32.totalorder %s53, %s54
      %p65 = scmp.eq.s32.totalorder %s19, 0
      %p66 = por %p64, %p65
      %p67 = scmp.ne.s32.totalorder %s53, %s54
      %p68 = scmp.eq.s32.totalorder %s20, 1
      %p69 = por %p67, %p68
      %p71 = scmp.ne.s32.totalorder %s54, %s70
      %p72 = scmp.eq.s32.totalorder %s20, 0
      %p73 = por %p71, %p72
      %s74 = ssub.s32 %s14, %s21
      %p75 = scmp.eq.s32.totalorder %s74, 0
      %s77 = sadd.s32 %s76, 1
      %s78 = scalar_select %p75, %s76, %s77
      %p81 = pneg %p75
      %p82 = scmp.eq.s32.totalorder %s14, 1
      %p83 = por %p81, %p82
      %p84 = scmp.ne.s32.totalorder %s76, %s79
      %p85 = scmp.eq.s32.totalorder %s14, 0
      %p86 = por %p84, %p85
      %p87 = scmp.ne.s32.totalorder %s76, %s79
      %p88 = scmp.eq.s32.totalorder %s19, 1
      %p89 = por %p87, %p88
      %p90 = scmp.ne.s32.totalorder %s79, %s80
      %p91 = scmp.eq.s32.totalorder %s19, 0
      %p92 = por %p90, %p91
      %p93 = scmp.ne.s32.totalorder %s79, %s80
      %p94 = scmp.eq.s32.totalorder %s20, 1
      %p95 = por %p93, %p94
      %p97 = scmp.ne.s32.totalorder %s80, %s96
      %p98 = scmp.eq.s32.totalorder %s20, 0
      %p99 = por %p97, %p98
      %p100 = scmp.le.s32.totalorder 1, %s14
      %p101 = scmp.lt.s32.totalorder %s14, 3
      %p102 = pnand %p100, %p101
      %p103 = pneg %p102
      // Predicated region
      $region9: #{positional_encoding_forward.1} parent=5 // pred_check
        _
      $region10: #{positional_encoding_forward.1} parent=5 // pred_check_branch
        %105 = sbr.rel (%p102) target = $region12
      $region11: #{positional_encoding_forward.1} parent=5 // pred_region
        %s106 = ssub.s32 %s14, 1
      $region12: #{positional_encoding_forward.1} parent=5 // pred_fallthru
        _
      %p107 = scmp.lt.s32.totalorder %s14, 2
      // Predicated region
      $region13: #{positional_encoding_forward.1} parent=5 // pred_check
        %p108 = pneg %p107
      $region14: #{positional_encoding_forward.1} parent=5 // pred_check_branch
        %110 = sbr.rel (%p108) target = $region16
      $region15: #{positional_encoding_forward.1} parent=5 // pred_region
        // Predicated region
        $region17: #{positional_encoding_forward.1} parent=15 // pred_check
          %p111 = pneg %p34
        $region18: #{positional_encoding_forward.1} parent=15 // pred_check_branch
          %113 = sbr.rel (%p111) target = $region20
        $region19: #{positional_encoding_forward.1} parent=15 // pred_region
          %s114 = sand.u32 %s24, 1
          %s115 = scalar_lea.sflag [#allocation3], %s114
          %s116 = sand.u32 %s24, 1
          %s117 = smul.addr %s116, 16
          %s118 = scalar_lea.vmem [#allocation2], %s117
          %120 = vsyncadd %s115, 0
          %s121 = smul.addr %s14, 8
          %s122 = scalar_lea.hbm %s0, %s121
          %s123 = sshll.u32 %s122, 4
          %s124 = int_to_ptr.hbm [resolvable:$true] %s123
          %s125 = sshll.u32 %s118, 4
          %s126 = int_to_ptr.vmem [resolvable:$true] %s125
          %131 = dma.hbm_to_vmem [thread:$0]  %s124, 256, %s126, %s115, 256, 128, 8
        $region20: #{positional_encoding_forward.1} parent=15 // pred_fallthru
          _
        // Predicated region
        $region21: #{positional_encoding_forward.1} parent=15 // pred_check
          %p132 = pneg %p60
        $region22: #{positional_encoding_forward.1} parent=15 // pred_check_branch
          %134 = sbr.rel (%p132) target = $region24
        $region23: #{positional_encoding_forward.1} parent=15 // pred_region
          %p135 = scmp.lt.s32.totalorder %s14, 1
          %s136 = scalar_select %p135, %s14, 1
          %s137 = smul.addr %s136, 8
          %s138 = scalar_lea.vmem %s1, %s137
        $region24: #{positional_encoding_forward.1} parent=15 // pred_fallthru
          _
      $region16: #{positional_encoding_forward.1} parent=5 // pred_fallthru
        _
      %p139 = scmp.le.s32.totalorder 1, %s14
      %p140 = scmp.lt.s32.totalorder %s14, 3
      %p141 = pnand %p139, %p140
      %p142 = pneg %p141
      // Predicated region
      $region25: #{positional_encoding_forward.1} parent=5 // pred_check
        _
      $region26: #{positional_encoding_forward.1} parent=5 // pred_check_branch
        %144 = sbr.rel (%p141) target = $region28
      $region27: #{positional_encoding_forward.1} parent=5 // pred_region
        %s145 = ssub.s32 %s14, 1
        %s146 = sand.u32 %s27, 1
        %s147 = scalar_lea.sflag [#allocation3], %s146
        %s148 = sand.u32 %s27, 1
        %s149 = smul.addr %s148, 16
        %s150 = scalar_lea.vmem [#allocation2], %s149
        // Predicated region
        $region29: #{positional_encoding_forward.1} parent=27 // pred_check
          %p151 = pneg %p40
        $region30: #{positional_encoding_forward.1} parent=27 // pred_check_branch
          %153 = sbr.rel (%p151) target = $region32
        $region31: #{positional_encoding_forward.1} parent=27 // pred_region
          %155 = dma.done %s147, 256
        $region32: #{positional_encoding_forward.1} parent=27 // pred_fallthru
          _
        %s156 = sand.u32 %s27, 1
        %s157 = scalar_lea.sflag [#allocation3], %s156
        %s158 = sand.u32 %s27, 1
        %s159 = smul.addr %s158, 16
        %s160 = scalar_lea.vmem [#allocation2], %s159
        %p161 = pneg %p40
        %p162 = pneg %p37
        %p163 = scmp.lt.s32.totalorder %s19, 1
        %s164 = scalar_select %p163, %s19, 1
        %s165 = smul.addr %s164, 8
        %s166 = scalar_lea.vmem %s1, %s165
        %p167 = pneg %p66
        %p168 = pneg %p63
        %p169 = pneg %p92
        %p170 = pneg %p89
        %s171 = sand.u32 %s79, 1
        %s172 = scalar_lea.sflag [#allocation4], %s171
        %s173 = sand.u32 %s79, 1
        %s174 = smul.addr %s173, 16
        %s175 = scalar_lea.vmem [#allocation5], %s174
        %p176 = scmp.lt.s32.totalorder %s19, 1
        %s177 = scalar_select %p176, %s19, 1
        %s178 = smul.addr %s177, 8
        %s179 = scalar_lea.vmem %s1, %s178
        %v180 = vld [vmem:[%s150] sm:$0xff]
        %v181 = vld [vmem:[%s150 + $0x8] sm:$0xff]
        %v182 = vld [vmem:[%s179] sm:$0xff]
        %v183 = vadd.f32 %v180, %v182
        %v184 = vadd.f32 %v181, %v182
        %185 = vst [vmem:[%s175] sm:$0xff] %v183
        %186 = vst [vmem:[%s175 + $0x8] sm:$0xff] %v184
        %s187 = sand.u32 %s79, 1
        %s188 = scalar_lea.sflag [#allocation4], %s187
        %s189 = sand.u32 %s79, 1
        %s190 = smul.addr %s189, 16
        %s191 = scalar_lea.vmem [#allocation5], %s190
        // Predicated region
        $region33: #{positional_encoding_forward.1} parent=27 // pred_check
          %p192 = pneg %p89
        $region34: #{positional_encoding_forward.1} parent=27 // pred_check_branch
          %194 = sbr.rel (%p192) target = $region36
        $region35: #{positional_encoding_forward.1} parent=27 // pred_region
          %196 = vsyncadd %s188, 0
          %s197 = smul.addr %s19, 8
          %s198 = scalar_lea.hbm %s2, %s197
          %s199 = sshll.u32 %s191, 4
          %s200 = int_to_ptr.vmem [resolvable:$true] %s199
          %s201 = sshll.u32 %s198, 4
          %s202 = int_to_ptr.hbm [resolvable:$true] %s201
          %207 = dma.vmem_to_hbm [thread:$0]  %s200, 256, %s202, %s188, 128, 256, 8
        $region36: #{positional_encoding_forward.1} parent=27 // pred_fallthru
          _
      $region28: #{positional_encoding_forward.1} parent=5 // pred_fallthru
        _
      %p208 = scmp.le.s32.totalorder 2, %s14
      // Predicated region
      $region37: #{positional_encoding_forward.1} parent=5 // pred_check
        %p209 = pneg %p208
      $region38: #{positional_encoding_forward.1} parent=5 // pred_check_branch
        %211 = sbr.rel (%p209) target = $region40
      $region39: #{positional_encoding_forward.1} parent=5 // pred_region
        %s212 = ssub.s32 %s14, 2
        // Predicated region
        $region41: #{positional_encoding_forward.1} parent=39 // pred_check
          %p213 = pneg %p95
        $region42: #{positional_encoding_forward.1} parent=39 // pred_check_branch
          %215 = sbr.rel (%p213) target = $region44
        $region43: #{positional_encoding_forward.1} parent=39 // pred_region
          %s216 = sand.u32 %s80, 1
          %s217 = scalar_lea.sflag [#allocation4], %s216
          %s218 = sand.u32 %s80, 1
          %s219 = smul.addr %s218, 16
          %s220 = scalar_lea.vmem [#allocation5], %s219
          %222 = dma.done %s217, 256
        $region44: #{positional_encoding_forward.1} parent=39 // pred_fallthru
          _
      $region40: #{positional_encoding_forward.1} parent=5 // pred_fallthru
        _
    $region6: #{positional_encoding_forward.1} parent=1 // loop_footer
      %s18 = sadd.s32 1, %s14
    $region7: #{positional_encoding_forward.1} parent=1 // loop_footer_branch
      %13 = sbr.rel target = $region3
    $region8: #{positional_encoding_forward.1} parent=1 // loop_exit
      _
    %223 = vsyncpa [#allocation3], 1
    %s224 = scalar_lea.sflag [#allocation3], 1
    %225 = vsyncpa %s224, 1
    %226 = vsyncpa [#allocation4], 1
    %s227 = scalar_lea.sflag [#allocation4], 1
    %228 = vsyncpa %s227, 1

</llo_original>
